<compile_context>
chip_gen: v6e
topology: v6e:2x2x1
jax: 0.10.0
libtpu: 0.0.40
codegen_flags: <defaults>
</compile_context>

<pallas_src>
import functools

import jax
import jax.numpy as jnp
import numpy as np
from jax.experimental import pallas as pl
from jax.experimental.pallas import tpu as pltpu


def _round_up(n: int, m: int) -> int:
    return ((n + m - 1) // m) * m


# ----------------------------- Pallas kernel --------------------------------
def _fused_linear_tanh_kernel(x2t_ref, wT_ref, tb_ref, o_ref):
    # x2t_ref: [2C, TE]    (f32)  -- edge axis on lanes (dense)
    # wT_ref : [d_out, 2C] (f32)  -- resident across the grid
    # tb_ref : [d_out, TE] (f32)  -- per-edge type rows + bias, precomputed
    # o_ref  : [d_out, TE] (f32)  -- lane-dense store
    acc = jnp.dot(wT_ref[...], x2t_ref[...], preferred_element_type=jnp.float32)
    o_ref[...] = jnp.tanh(acc + tb_ref[...]).astype(o_ref.dtype)


def _fused_linear_tanh_T(x2t, wT, tbT, tile_e):
    """tanh(wT @ x2t + tbT), tiled over the (lane) edge axis."""
    k, e_pad = x2t.shape
    d_out = wT.shape[0]
    grid = (e_pad // tile_e,)
    return pl.pallas_call(
        _fused_linear_tanh_kernel,
        out_shape=jax.ShapeDtypeStruct((d_out, e_pad), jnp.float32),
        grid_spec=pltpu.PrefetchScalarGridSpec(
            num_scalar_prefetch=0,
            grid=grid,
            in_specs=[
                pl.BlockSpec((k, tile_e), lambda i: (0, i)),       # x2t tile
                pl.BlockSpec((d_out, k), lambda i: (0, 0)),        # weights (resident)
                pl.BlockSpec((d_out, tile_e), lambda i: (0, i)),   # type-bias tile
            ],
            out_specs=pl.BlockSpec((d_out, tile_e), lambda i: (0, i)),
        ),
        compiler_params=pltpu.CompilerParams(
            dimension_semantics=("parallel",),  # edge axis shards across cores
        ),
    )(x2t, wT, tbT)


# ----------------------------- jitted forward --------------------------------
@functools.partial(
    jax.jit,
    static_argnames=("num_node_types", "num_edge_types", "tile_e_cap"),
)
def _forward_impl(w, b, x, edge_index, edge_types, node_types, *,
                  num_node_types, num_edge_types, tile_e_cap=1024):
    src, dst = edge_index[0], edge_index[1]
    E = src.shape[0]
    C = x.shape[1]

    # Split the concatenated Linear weight: one-hot @ W is a row lookup of W.
    w_x = w[: 2 * C]                                                  # [2C, d_out]
    w_nt_src = w[2 * C: 2 * C + num_node_types]                       # [Nt, d_out]
    w_nt_dst = w[2 * C + num_node_types: 2 * C + 2 * num_node_types]  # [Nt, d_out]
    w_et = w[2 * C + 2 * num_node_types:]                             # [Et, d_out]

    # Edge features with the edge axis on lanes: [2C, E].
    x_t = x.T.astype(jnp.float32)
    x2t = jnp.concatenate([x_t[:, src], x_t[:, dst]], axis=0)

    # Type contributions + bias, precomputed per edge (replaces one-hot matmuls).
    tb = (jnp.take(w_nt_src, node_types[src], axis=0)
          + jnp.take(w_nt_dst, node_types[dst], axis=0)
          + jnp.take(w_et, edge_types, axis=0)
          + b[None, :]).astype(jnp.float32)                            # [E, d_out]
    tbT = tb.T                                                         # [d_out, E]

    # Pad the edge (lane) axis to a tile multiple; big tiles amortize grid overhead.
    tile_e = min(tile_e_cap, max(128, _round_up(E, 128)))
    e_pad = _round_up(E, tile_e)
    if e_pad != E:
        x2t = jnp.pad(x2t, ((0, 0), (0, e_pad - E)))
        tbT = jnp.pad(tbT, ((0, 0), (0, e_pad - E)))

    wT = w_x.T.astype(jnp.float32)                                     # [d_out, 2C]

    # TODO(synk): a bf16-input matmul (f32 accumulation) would halve HBM bytes on
    # the dominant stream on v6e/v7x, but the mixed-dtype dot is not supported by
    # every executor backend, so the portable f32 path is used here.
    outT = _fused_linear_tanh_T(x2t, wT, tbT, tile_e)                  # [d_out, e_pad]
    return outT[:, :E].T                                               # [E, d_out]


# --------------------------- Module (JAX glue) -------------------------------
class TypeConcatSheafLearnerPallas:
    """JAX/Pallas port of TypeConcatSheafLearner (num_layers=1 MLP == Linear)."""

    def __init__(self, in_channels, out_shape, sheaf_act="tanh",
                 num_node_types=4, num_edge_types=12, hidden_channels=64,
                 tile_e_cap=1024, key=jax.random.PRNGKey(0)):
        assert len(out_shape) in (1, 2)
        assert sheaf_act == "tanh"  # tanh is fused into the kernel
        # TODO(synk): num_layers > 1 MLP (hidden layers / normalisation) not
        #             implemented; the reference default num_layers=1 is a Linear.
        self.out_shape = out_shape
        self.num_node_types = num_node_types
        self.num_edge_types = num_edge_types
        self.tile_e_cap = tile_e_cap
        d_in = 2 * in_channels + 2 * num_node_types + num_edge_types
        d_out = int(np.prod(out_shape))
        kw, kb = jax.random.split(key)
        bound = 1.0 / np.sqrt(d_in)
        self.w = jax.random.uniform(kw, (d_in, d_out), jnp.float32, -bound, bound)
        self.b = jax.random.uniform(kb, (d_out,), jnp.float32, -bound, bound)

    def __call__(self, x, edge_index, edge_types, node_types):
        maps = _forward_impl(
            self.w, self.b, x, edge_index, edge_types, node_types,
            num_node_types=self.num_node_types,
            num_edge_types=self.num_edge_types,
            tile_e_cap=self.tile_e_cap)
        if len(self.out_shape) == 2:
            return maps.reshape(-1, self.out_shape[0], self.out_shape[1])
        return maps.reshape(-1, self.out_shape[0])


# ------------------------------ Reference ------------------------------------
def _reference(model, x, edge_index, edge_types, node_types):
    src, dst = edge_index[0], edge_index[1]
    node_oh = jax.nn.one_hot(node_types, model.num_node_types, dtype=x.dtype)
    edge_oh = jax.nn.one_hot(edge_types, model.num_edge_types, dtype=x.dtype)
    x_cat = jnp.concatenate(
        [x[src], x[dst], node_oh[src], node_oh[dst], edge_oh], axis=1)
    maps = jnp.tanh(x_cat @ model.w + model.b)
    if len(model.out_shape) == 2:
        return maps.reshape(-1, model.out_shape[0], model.out_shape[1])
    return maps.reshape(-1, model.out_shape[0])


if __name__ == "__main__":
    key = jax.random.PRNGKey(0)
    k_x, k_src, k_dst, k_et, k_nt, k_par = jax.random.split(key, 6)

    N = 16            # nodes
    C = 8             # in_channels
    E = 30            # edges (non-multiple of tile to exercise padding)
    NUM_NODE_TYPES = 4
    NUM_EDGE_TYPES = 12
    OUT_SHAPE = (2, 2)

    x = jax.random.normal(k_x, (N, C), jnp.float32)
    src = jax.random.randint(k_src, (E,), 0, N)
    dst = jax.random.randint(k_dst, (E,), 0, N)
    edge_index = jnp.stack([src, dst], axis=0)          # [2, E]
    edge_types = jax.random.randint(k_et, (E,), 0, NUM_EDGE_TYPES)
    node_types = jax.random.randint(k_nt, (N,), 0, NUM_NODE_TYPES)

    model = TypeConcatSheafLearnerPallas(
        in_channels=C, out_shape=OUT_SHAPE, sheaf_act="tanh",
        num_node_types=NUM_NODE_TYPES, num_edge_types=NUM_EDGE_TYPES,
        key=k_par)

    out = model(x, edge_index, edge_types, node_types)
    out = jax.block_until_ready(out)

    ref = _reference(model, x, edge_index, edge_types, node_types)
    assert out.shape == (E, OUT_SHAPE[0], OUT_SHAPE[1]), out.shape
    np.testing.assert_allclose(np.asarray(out), np.asarray(ref),
                               rtol=1e-5, atol=1e-5)
    print("KERNEL_OK")
</pallas_src>

<mosaic_0001>
module attributes {stable_mosaic.version = 11 : i64} {
  func.func @_fused_linear_tanh_kernel(%arg0: i32, %arg1: memref<16x128xf32, #tpu.memory_space<vmem>>, %arg2: memref<4x16xf32, #tpu.memory_space<vmem>>, %arg3: memref<4x128xf32, #tpu.memory_space<vmem>>, %arg4: memref<4x128xf32, #tpu.memory_space<vmem>>) attributes {dimension_semantics = [#tpu.dimension_semantics<parallel>], iteration_bounds = array<i64: 1>, scalar_prefetch = 0 : i64, scratch_operands = 0 : i64, tpu.core_type = #tpu.core_type<tc>, window_params = [{transform_indices = @transform_0, window_bounds = array<i64: 16, 128>}, {pipeline_mode = #tpu.pipeline_mode<synchronous>, transform_indices = @transform_1, window_bounds = array<i64: 4, 16>}, {transform_indices = @transform_2, window_bounds = array<i64: 4, 128>}, {transform_indices = @transform_3, window_bounds = array<i64: 4, 128>}]} {
    %c0 = arith.constant 0 : index
    %c0_0 = arith.constant 0 : index
    %0 = vector.load %arg2[%c0, %c0_0] : memref<4x16xf32, #tpu.memory_space<vmem>>, vector<4x16xf32>
    %c0_1 = arith.constant 0 : index
    %c0_2 = arith.constant 0 : index
    %1 = vector.load %arg1[%c0_1, %c0_2] : memref<16x128xf32, #tpu.memory_space<vmem>>, vector<16x128xf32>
    %cst = arith.constant dense<0.000000e+00> : vector<4x128xf32>
    %2 = tpu.matmul %0, %1, %cst {dimension_numbers = #tpu.dot_dimension_numbers<[1], [0], [0], [1], [0, 0, 1, 1], [], []>} : vector<4x16xf32>, vector<16x128xf32>, vector<4x128xf32> -> vector<4x128xf32>
    %c0_3 = arith.constant 0 : index
    %c0_4 = arith.constant 0 : index
    %3 = vector.load %arg3[%c0_3, %c0_4] : memref<4x128xf32, #tpu.memory_space<vmem>>, vector<4x128xf32>
    %4 = arith.addf %2, %3 : vector<4x128xf32>
    %5 = math.tanh %4 : vector<4x128xf32>
    %c0_5 = arith.constant 0 : index
    %c0_6 = arith.constant 0 : index
    %6 = vector.load %arg4[%c0_5, %c0_6] : memref<4x128xf32, #tpu.memory_space<vmem>>, vector<4x128xf32>
    tpu.vector_store %arg4[%c0_5, %c0_6], %5 {strides = array<i32>} : memref<4x128xf32, #tpu.memory_space<vmem>>, vector<4x128xf32>,
    return
  }
  func.func @transform_0(%arg0: i32) -> (i32, i32) {
    %c0_i32 = arith.constant 0 : i32
    %c0_i32_0 = arith.constant 0 : i32
    return %c0_i32, %arg0 : i32, i32
  }
  func.func @transform_1(%arg0: i32) -> (i32, i32) {
    %c0_i32 = arith.constant 0 : i32
    %c0_i32_0 = arith.constant 0 : i32
    %c0_i32_1 = arith.constant 0 : i32
    return %c0_i32, %c0_i32_0 : i32, i32
  }
  func.func @transform_2(%arg0: i32) -> (i32, i32) {
    %c0_i32 = arith.constant 0 : i32
    %c0_i32_0 = arith.constant 0 : i32
    return %c0_i32, %arg0 : i32, i32
  }
  func.func @transform_3(%arg0: i32) -> (i32, i32) {
    %c0_i32 = arith.constant 0 : i32
    %c0_i32_0 = arith.constant 0 : i32
    return %c0_i32, %arg0 : i32, i32
  }
}

</mosaic_0001>

<llo_original>
// kernel: _forward_impl.1
$region0: #{_forward_impl.1}
  #allocation0 [shape = 'u32[]', space=smem, size = 0x4, offset = 0x4, fixed_abs, tag = 'smem constant byte address 0x4 - core index']
  #allocation1 [shape = 'u32[144,128]{1,0:T(1,128)}', space=vmem, size = 0x12000, scoped, tag = 'internal scratch']
  %s0 = inlined_call_operand.vmem [shape: f32[16,128], index: 0, kind: input, shape index: {}]
  %s1 = inlined_call_operand.vmem [shape: f32[4,16], index: 1, kind: input, shape index: {}]
  %s2 = inlined_call_operand.vmem [shape: f32[4,128], index: 2, kind: input, shape index: {}]
  %s3 = inlined_call_operand.vmem [shape: f32[4,128], index: 3, kind: output, shape index: {}]
  %s4 = sld [smem:[#allocation0]]
  $region22: #{_forward_impl.1} parent=0
    _
  %s6 = ssub.s32 1, %s4
  %s7 = scalar_select 0, %s6, %s4
  // Predicated region
  $region2: #{_forward_impl.1} parent=0 // pred_check
    _
  $region3: #{_forward_impl.1} parent=0 // pred_check_branch
    %9 = sbr.rel (0) target = $region5
  $region4: #{_forward_impl.1} parent=0 // pred_region
    _
  $region5: #{_forward_impl.1} parent=0 // pred_fallthru
    _
  // Predicated region
  $region6: #{_forward_impl.1} parent=0 // pred_check
    _
  $region7: #{_forward_impl.1} parent=0 // pred_check_branch
    %11 = sbr.rel (0) target = $region9
  $region8: #{_forward_impl.1} parent=0 // pred_region
    _
  $region9: #{_forward_impl.1} parent=0 // pred_fallthru
    _
  // Predicated region
  $region10: #{_forward_impl.1} parent=0 // pred_check
    _
  $region11: #{_forward_impl.1} parent=0 // pred_check_branch
    %13 = sbr.rel (0) target = $region13
  $region12: #{_forward_impl.1} parent=0 // pred_region
    _
  $region13: #{_forward_impl.1} parent=0 // pred_fallthru
    _
  %v14 = vld [vmem:[%s1] sm:$0xf]
  %v15 = vld [vmem:[%s0] sm:$0xff]
  %v16 = vld [vmem:[%s0 + $0x8] sm:$0xff]
  %v17 = vld [vmem:[%s2] sm:$0xf]
  %vm18 = vcmask 130048
  %v20 = vsel %vm18, %v14, 0
  %22 = vmatprep.subr.mxu0 0.0
  %23 = vmatpush1.msra.mxu0 0.0
  %24 = vmatprep.subr.mxu0 0.0
  %25 = vmatpush1.msra.mxu0 0.0
  %26 = vmatprep.subr.mxu0 0.0
  %27 = vmatpush1.msra.mxu0 0.0
  %28 = vmatprep.subr.mxu0 0.0
  %29 = vmatpush1.msra.mxu0 0.0
  %30 = vmatprep.subr.mxu0 0.0
  %31 = vmatpush1.msra.mxu0 0.0
  %32 = vmatprep.subr.mxu0 0.0
  %33 = vmatpush1.msra.mxu0 0.0
  %34 = vmatprep.subr.mxu0 0.0
  %35 = vmatpush1.msra.mxu0 0.0
  %36 = vmatprep.subr.mxu0 0.0
  %37 = vmatpush1.msra.mxu0 0.0
  %38 = vmatprep.subr.mxu0 0.0
  %39 = vmatpush1.msra.mxu0 0.0
  %40 = vmatprep.subr.mxu0 0.0
  %41 = vmatpush1.msra.mxu0 0.0
  %42 = vmatprep.subr.mxu0 0.0
  %43 = vmatpush1.msra.mxu0 0.0
  %44 = vmatprep.subr.mxu0 0.0
  %45 = vmatpush1.msra.mxu0 0.0
  %46 = vmatprep.subr.mxu0 0.0
  %47 = vmatpush1.msra.mxu0 0.0
  %48 = vmatprep.subr.mxu0 0.0
  %49 = vmatpush1.msra.mxu0 0.0
  %50 = vmatprep.subr.mxu0 0.0
  %51 = vmatpush1.msra.mxu0 %v16
  %52 = vmatprep.subr.mxu0 0.0
  %53 = vmatpush1.msra.mxu0 %v15
  %54 = vmatprep.subr.mxu0 0.0
  %55 = vmatpush2.msra.mxu0 0.0
  %56 = vmatprep.subr.mxu0 0.0
  %57 = vmatpush2.msra.mxu0 0.0
  %58 = vmatprep.subr.mxu0 0.0
  %59 = vmatpush2.msra.mxu0 0.0
  %60 = vmatprep.subr.mxu0 0.0
  %61 = vmatpush2.msra.mxu0 0.0
  %62 = vmatprep.subr.mxu0 0.0
  %63 = vmatpush2.msra.mxu0 0.0
  %64 = vmatprep.subr.mxu0 0.0
  %65 = vmatpush2.msra.mxu0 0.0
  %66 = vmatprep.subr.mxu0 0.0
  %67 = vmatpush2.msra.mxu0 0.0
  %68 = vmatprep.subr.mxu0 0.0
  %69 = vmatpush2.msra.mxu0 0.0
  %70 = vmatprep.subr.mxu0 0.0
  %71 = vmatpush2.msra.mxu0 0.0
  %72 = vmatprep.subr.mxu0 0.0
  %73 = vmatpush2.msra.mxu0 0.0
  %74 = vmatprep.subr.mxu0 0.0
  %75 = vmatpush2.msra.mxu0 0.0
  %76 = vmatprep.subr.mxu0 0.0
  %77 = vmatpush2.msra.mxu0 0.0
  %78 = vmatprep.subr.mxu0 0.0
  %79 = vmatpush2.msra.mxu0 0.0
  %80 = vmatprep.subr.mxu0 0.0
  %81 = vmatpush2.msra.mxu0 0.0
  %82 = vmatprep.subr.mxu0 0.0
  %83 = vmatpush2.msra.mxu0 0.0
  %84 = vmatprep.subr.mxu0 0.0
  %85 = vmatpush2.msra.mxu0 0.0
  %86 = vmatprep.mubr.f32.mxu0 0.0
  %87 = vmatmul.mubr.f32.gmra.mxu0 %v20
  %v88 = vpop.f32.mrf.mxu0
  %v89 = vadd.f32 %v17, %v88
  %v90 = vpop.f32.mrf.mxu0
  %91 = vdwg.mxu0
  %v92 = vtanh.pop %v89
  %93 = vst [vmem:[%s3] sm:$0xf] %v92
  // Predicated region
  $region14: #{_forward_impl.1} parent=0 // pred_check
    _
  $region15: #{_forward_impl.1} parent=0 // pred_check_branch
    %95 = sbr.rel (0) target = $region17
  $region16: #{_forward_impl.1} parent=0 // pred_region
    _
  $region17: #{_forward_impl.1} parent=0 // pred_fallthru
    _
  // Predicated region
  $region18: #{_forward_impl.1} parent=0 // pred_check
    _
  $region19: #{_forward_impl.1} parent=0 // pred_check_branch
    %97 = sbr.rel (0) target = $region21
  $region20: #{_forward_impl.1} parent=0 // pred_region
    _
  $region21: #{_forward_impl.1} parent=0 // pred_fallthru
    _

</llo_original>
